<compile_context>
chip_gen: v6e
topology: v6e:2x2x1
jax: 0.10.0
libtpu: 0.0.40
codegen_flags: <defaults>
</compile_context>

<pallas_src>
import jax
import jax.numpy as jnp
from jax.experimental import pallas as pl
from jax.experimental.pallas import tpu as pltpu

HIDDEN = 256
LANE = 128            # lane width / feature-axis padding quantum
SUBLANE_BF16 = 16     # bf16 sublane packing -> round batch tiles to 16
MAX_BATCH_TILE = 1024 # overhead-bound kernel: fewer, bigger tiles


def _round_up(x, m):
    return ((x + m - 1) // m) * m


def _cdiv(a, b):
    return (a + b - 1) // b


# ----------------------------------------------------------------------------
# Kernel: one batch tile.
#   x (tb, in_pad) -> relu(x@w1+b1) -> relu(h1@w2+b2) -> h2@w3+b3 -> (tb, 1)
# All three matmuls run on the MXU with f32 accumulation; epilogues are f32
# VPU ops.  No transposes, no cross-lane reductions.
# ----------------------------------------------------------------------------
def soft_q_kernel(x_ref, w1_ref, b1_ref, w2_ref, b2_ref, w3_ref, b3_ref,
                  o_ref):
    h1 = jnp.dot(x_ref[...], w1_ref[...], preferred_element_type=jnp.float32)
    h1 = jnp.maximum(h1 + b1_ref[...], 0.0)                       # (tb, H) f32

    h2 = jnp.dot(h1.astype(w2_ref.dtype), w2_ref[...],
                 preferred_element_type=jnp.float32)
    h2 = jnp.maximum(h2 + b2_ref[...], 0.0)                       # (tb, H) f32

    q = jnp.dot(h2.astype(w3_ref.dtype), w3_ref[...],
                preferred_element_type=jnp.float32)               # (tb, 1) f32
    o_ref[...] = (q + b3_ref[0]).astype(o_ref.dtype)              # b3: SMEM scalar


# ----------------------------------------------------------------------------
# One-time parameter packing (hoisted out of the per-step path).
# ----------------------------------------------------------------------------
def prepare_params(params, obs_dim, act_dim, matmul_dtype=jnp.bfloat16):
    """Pack/cast weights once: zero-pad w1's K axis to a lane multiple, cast
    matmul operands to `matmul_dtype`, keep biases f32, b3 as an SMEM scalar."""
    w1, b1, w2, b2, w3, b3 = params
    in_dim = obs_dim + act_dim
    in_pad = _round_up(in_dim, LANE)

    w1p = jnp.zeros((in_pad, HIDDEN), matmul_dtype)
    w1p = w1p.at[:in_dim].set(w1.astype(matmul_dtype))            # zero K-pad
    return {
        "w1": w1p,
        "b1": b1.reshape(1, HIDDEN).astype(jnp.float32),
        "w2": w2.astype(matmul_dtype),
        "b2": b2.reshape(1, HIDDEN).astype(jnp.float32),
        "w3": w3.astype(matmul_dtype),
        "b3": b3.reshape(1).astype(jnp.float32),
        "in_dim": in_dim,
        "in_pad": in_pad,
        "matmul_dtype": matmul_dtype,
    }


def _vmem_limit_bytes(tb, in_pad, matmul_dtype):
    """Explicit scoped-VMEM budget from the tile math (review: don't rely on
    generation-dependent defaults, esp. v7x's 64 MiB physical / 32 MiB scoped)."""
    isz = jnp.dtype(matmul_dtype).itemsize
    x_stream = 2 * tb * in_pad * isz                   # double-buffered input tile
    weights = (in_pad * HIDDEN + HIDDEN * HIDDEN + HIDDEN) * isz
    biases = 2 * HIDDEN * 4
    acts = 2 * tb * HIDDEN * 4                         # h1 / h2 f32
    casts = 2 * tb * HIDDEN * isz                      # bf16 copies feeding MXU
    out = 2 * tb * 4
    need = x_stream + weights + biases + acts + casts + out
    return int(min(32 * 1024 * 1024, max(16 * 1024 * 1024, 2 * need)))


# ----------------------------------------------------------------------------
# Per-step forward: pack activations, pick balanced batch tiles, pallas_call.
# ----------------------------------------------------------------------------
def soft_q_forward(obs, action, prep):
    """obs: (B, obs_dim), action: (B, act_dim) -> q: (B, 1) float32."""
    B = obs.shape[0]
    in_dim, in_pad = prep["in_dim"], prep["in_pad"]
    dt = prep["matmul_dtype"]

    # One wide, contiguous input slab (B, in_pad): obs|action packed and
    # zero-padded on the feature axis -> each tile-DMA row is >=256 B (bf16).
    x = jnp.concatenate([obs, action], axis=1).astype(dt)
    if in_pad != in_dim:
        x = jnp.pad(x, ((0, 0), (0, in_pad - in_dim)))

    # Balanced batch tiles, rounded to the bf16 sublane quantum.  Force >=2
    # tiles for non-tiny batches so the "parallel" axis shards across v7x's
    # 2 TensorCores (grid=(1,) would make the annotation a no-op).
    n_tiles = max(1, _cdiv(B, MAX_BATCH_TILE))
    if B >= 2 * SUBLANE_BF16:
        n_tiles = max(n_tiles, 2)
    tb = _round_up(_cdiv(B, n_tiles), SUBLANE_BF16)
    b_pad = _round_up(B, tb)
    if b_pad != B:
        x = jnp.pad(x, ((0, b_pad - B), (0, 0)))
    n_tiles = b_pad // tb

    out = pl.pallas_call(
        soft_q_kernel,
        out_shape=jax.ShapeDtypeStruct((b_pad, 1), jnp.float32),
        grid=(n_tiles,),
        in_specs=[
            pl.BlockSpec((tb, in_pad), lambda i: (i, 0)),          # packed x tile
            pl.BlockSpec((in_pad, HIDDEN), lambda i: (0, 0)),      # w1 (resident)
            pl.BlockSpec((1, HIDDEN), lambda i: (0, 0)),           # b1
            pl.BlockSpec((HIDDEN, HIDDEN), lambda i: (0, 0)),      # w2 (resident)
            pl.BlockSpec((1, HIDDEN), lambda i: (0, 0)),           # b2
            pl.BlockSpec((HIDDEN, 1), lambda i: (0, 0)),           # w3
            pl.BlockSpec(memory_space=pltpu.MemorySpace.SMEM),     # b3 scalar
        ],
        out_specs=pl.BlockSpec((tb, 1), lambda i: (i, 0)),         # q column tile
        compiler_params=pltpu.CompilerParams(
            dimension_semantics=("parallel",),
            vmem_limit_bytes=_vmem_limit_bytes(tb, in_pad, dt)),
    )(x, prep["w1"], prep["b1"], prep["w2"], prep["b2"], prep["w3"], prep["b3"])

    return out[:B]


# ----------------------------------------------------------------------------
# Parameter init (nn.Linear default: uniform +-1/sqrt(fan_in); weights stored
# pre-transposed as (in_features, out_features)) and pure-JAX reference.
# ----------------------------------------------------------------------------
def init_params(key, obs_dim, act_dim):
    d_in = obs_dim + act_dim
    k1, k2, k3, k4, k5, k6 = jax.random.split(key, 6)

    def uniform(k, shape, fan_in):
        bound = 1.0 / jnp.sqrt(jnp.float32(fan_in))
        return jax.random.uniform(k, shape, jnp.float32, -bound, bound)

    w1 = uniform(k1, (d_in, HIDDEN), d_in)
    b1 = uniform(k2, (1, HIDDEN), d_in)
    w2 = uniform(k3, (HIDDEN, HIDDEN), HIDDEN)
    b2 = uniform(k4, (1, HIDDEN), HIDDEN)
    w3 = uniform(k5, (HIDDEN, 1), HIDDEN)
    b3 = uniform(k6, (1,), HIDDEN)
    return (w1, b1, w2, b2, w3, b3)


def reference_forward(obs, action, params, matmul_dtype=jnp.float32):
    """Matches the PyTorch forward, optionally with the kernel's
    bf16-operand / f32-accumulate scheme."""
    w1, b1, w2, b2, w3, b3 = params
    x = jnp.concatenate([obs, action], axis=1)
    h1 = jnp.dot(x.astype(matmul_dtype), w1.astype(matmul_dtype),
                 preferred_element_type=jnp.float32) + b1.reshape(1, -1)
    h1 = jnp.maximum(h1, 0.0)
    h2 = jnp.dot(h1.astype(matmul_dtype), w2.astype(matmul_dtype),
                 preferred_element_type=jnp.float32) + b2.reshape(1, -1)
    h2 = jnp.maximum(h2, 0.0)
    q = jnp.dot(h2.astype(matmul_dtype), w3.astype(matmul_dtype),
                preferred_element_type=jnp.float32) + b3
    return q


if __name__ == "__main__":
    # Small synthetic env: obs_dim=17, act_dim=6, batch=8
    B, OBS_DIM, ACT_DIM = 8, 17, 6

    key = jax.random.PRNGKey(0)
    k_obs, k_act, k_params = jax.random.split(key, 3)
    obs = jax.random.normal(k_obs, (B, OBS_DIM), jnp.float32)
    action = jax.random.uniform(k_act, (B, ACT_DIM), jnp.float32, -1.0, 1.0)
    params = init_params(k_params, OBS_DIM, ACT_DIM)

    # Full-f32 path: must match the PyTorch-style reference tightly.
    prep32 = prepare_params(params, OBS_DIM, ACT_DIM, matmul_dtype=jnp.float32)
    q32 = jax.block_until_ready(soft_q_forward(obs, action, prep32))
    ref32 = reference_forward(obs, action, params, jnp.float32)
    assert q32.shape == (B, 1)
    assert jnp.allclose(q32, ref32, atol=1e-4, rtol=1e-4)

    # Default path: bf16 MXU operands, f32 accumulation and epilogue.
    prepbf = prepare_params(params, OBS_DIM, ACT_DIM, matmul_dtype=jnp.bfloat16)
    qbf = jax.block_until_ready(soft_q_forward(obs, action, prepbf))
    refbf = reference_forward(obs, action, params, jnp.bfloat16)
    assert qbf.shape == (B, 1)
    assert jnp.allclose(qbf, refbf, atol=2e-3, rtol=2e-3)
    assert jnp.allclose(qbf, ref32, atol=5e-2, rtol=5e-2)

    # Larger batch to exercise multi-tile (parallel) path.
    B2 = 600
    obs2 = jax.random.normal(jax.random.PRNGKey(1), (B2, OBS_DIM), jnp.float32)
    act2 = jax.random.uniform(jax.random.PRNGKey(2), (B2, ACT_DIM),
                              jnp.float32, -1.0, 1.0)
    q2 = jax.block_until_ready(soft_q_forward(obs2, act2, prepbf))
    ref2 = reference_forward(obs2, act2, params, jnp.bfloat16)
    assert q2.shape == (B2, 1)
    assert jnp.allclose(q2, ref2, atol=2e-3, rtol=2e-3)

    print("KERNEL_OK")
</pallas_src>

<mosaic_0001>
module attributes {stable_mosaic.version = 11 : i64} {
  func.func @soft_q_kernel(%arg0: i32, %arg1: memref<16x128xf32, #tpu.memory_space<vmem>>, %arg2: memref<128x256xf32, #tpu.memory_space<vmem>>, %arg3: memref<1x256xf32, #tpu.memory_space<vmem>>, %arg4: memref<256x256xf32, #tpu.memory_space<vmem>>, %arg5: memref<1x256xf32, #tpu.memory_space<vmem>>, %arg6: memref<256x1xf32, #tpu.memory_space<vmem>>, %arg7: memref<1xf32, #tpu.memory_space<smem>>, %arg8: memref<16x1xf32, #tpu.memory_space<vmem>>) attributes {dimension_semantics = [#tpu.dimension_semantics<parallel>], iteration_bounds = array<i64: 1>, scalar_prefetch = 0 : i64, scratch_operands = 0 : i64, tpu.core_type = #tpu.core_type<tc>, window_params = [{transform_indices = @transform_0, window_bounds = array<i64: 16, 128>}, {pipeline_mode = #tpu.pipeline_mode<synchronous>, transform_indices = @transform_1, window_bounds = array<i64: 128, 256>}, {pipeline_mode = #tpu.pipeline_mode<synchronous>, transform_indices = @transform_2, window_bounds = array<i64: 1, 256>}, {pipeline_mode = #tpu.pipeline_mode<synchronous>, transform_indices = @transform_3, window_bounds = array<i64: 256, 256>}, {pipeline_mode = #tpu.pipeline_mode<synchronous>, transform_indices = @transform_4, window_bounds = array<i64: 1, 256>}, {pipeline_mode = #tpu.pipeline_mode<synchronous>, transform_indices = @transform_5, window_bounds = array<i64: 256, 1>}, {transform_indices = @transform_6, window_bounds = array<i64: 1>}, {transform_indices = @transform_7, window_bounds = array<i64: 16, 1>}]} {
    %c0 = arith.constant 0 : index
    %c0_0 = arith.constant 0 : index
    %0 = vector.load %arg1[%c0, %c0_0] : memref<16x128xf32, #tpu.memory_space<vmem>>, vector<16x128xf32>
    %c0_1 = arith.constant 0 : index
    %c0_2 = arith.constant 0 : index
    %1 = vector.load %arg2[%c0_1, %c0_2] : memref<128x256xf32, #tpu.memory_space<vmem>>, vector<128x256xf32>
    %cst = arith.constant dense<0.000000e+00> : vector<16x256xf32>
    %2 = tpu.matmul %0, %1, %cst {dimension_numbers = #tpu.dot_dimension_numbers<[1], [0], [0], [1], [0, 0, 1, 1], [], []>} : vector<16x128xf32>, vector<128x256xf32>, vector<16x256xf32> -> vector<16x256xf32>
    %c0_3 = arith.constant 0 : index
    %c0_4 = arith.constant 0 : index
    %3 = vector.load %arg3[%c0_3, %c0_4] : memref<1x256xf32, #tpu.memory_space<vmem>>, vector<1x256xf32>
    %4 = vector.broadcast %3 : vector<1x256xf32> to vector<16x256xf32>
    %5 = arith.addf %2, %4 : vector<16x256xf32>
    %cst_5 = arith.constant 0.000000e+00 : f32
    %6 = vector.broadcast %cst_5 : f32 to vector<16x256xf32>
    %7 = arith.maximumf %5, %6 : vector<16x256xf32>
    %c0_6 = arith.constant 0 : index
    %c0_7 = arith.constant 0 : index
    %8 = vector.load %arg4[%c0_6, %c0_7] : memref<256x256xf32, #tpu.memory_space<vmem>>, vector<256x256xf32>
    %cst_8 = arith.constant dense<0.000000e+00> : vector<16x256xf32>
    %9 = tpu.matmul %7, %8, %cst_8 {dimension_numbers = #tpu.dot_dimension_numbers<[1], [0], [0], [1], [0, 0, 1, 1], [], []>} : vector<16x256xf32>, vector<256x256xf32>, vector<16x256xf32> -> vector<16x256xf32>
    %c0_9 = arith.constant 0 : index
    %c0_10 = arith.constant 0 : index
    %10 = vector.load %arg5[%c0_9, %c0_10] : memref<1x256xf32, #tpu.memory_space<vmem>>, vector<1x256xf32>
    %11 = vector.broadcast %10 : vector<1x256xf32> to vector<16x256xf32>
    %12 = arith.addf %9, %11 : vector<16x256xf32>
    %cst_11 = arith.constant 0.000000e+00 : f32
    %13 = vector.broadcast %cst_11 : f32 to vector<16x256xf32>
    %14 = arith.maximumf %12, %13 : vector<16x256xf32>
    %c0_12 = arith.constant 0 : index
    %c0_13 = arith.constant 0 : index
    %15 = vector.load %arg6[%c0_12, %c0_13] : memref<256x1xf32, #tpu.memory_space<vmem>>, vector<256x1xf32>
    %cst_14 = arith.constant dense<0.000000e+00> : vector<16x1xf32>
    %16 = tpu.matmul %14, %15, %cst_14 {dimension_numbers = #tpu.dot_dimension_numbers<[1], [0], [0], [1], [0, 0, 1, 1], [], []>} : vector<16x256xf32>, vector<256x1xf32>, vector<16x1xf32> -> vector<16x1xf32>
    %c0_15 = arith.constant 0 : index
    %17 = memref.load %arg7[%c0_15] : memref<1xf32, #tpu.memory_space<smem>>
    %18 = vector.broadcast %17 : f32 to vector<16x1xf32>
    %19 = arith.addf %16, %18 : vector<16x1xf32>
    %c0_16 = arith.constant 0 : index
    %c0_17 = arith.constant 0 : index
    %20 = vector.load %arg8[%c0_16, %c0_17] : memref<16x1xf32, #tpu.memory_space<vmem>>, vector<16x1xf32>
    tpu.vector_store %arg8[%c0_16, %c0_17], %19 {strides = array<i32>} : memref<16x1xf32, #tpu.memory_space<vmem>>, vector<16x1xf32>,
    return
  }
  func.func @transform_0(%arg0: i32) -> (i32, i32) {
    %c0_i32 = arith.constant 0 : i32
    %c0_i32_0 = arith.constant 0 : i32
    return %arg0, %c0_i32 : i32, i32
  }
  func.func @transform_1(%arg0: i32) -> (i32, i32) {
    %c0_i32 = arith.constant 0 : i32
    %c0_i32_0 = arith.constant 0 : i32
    %c0_i32_1 = arith.constant 0 : i32
    return %c0_i32, %c0_i32_0 : i32, i32
  }
  func.func @transform_2(%arg0: i32) -> (i32, i32) {
    %c0_i32 = arith.constant 0 : i32
    %c0_i32_0 = arith.constant 0 : i32
    %c0_i32_1 = arith.constant 0 : i32
    return %c0_i32, %c0_i32_0 : i32, i32
  }
  func.func @transform_3(%arg0: i32) -> (i32, i32) {
    %c0_i32 = arith.constant 0 : i32
    %c0_i32_0 = arith.constant 0 : i32
    %c0_i32_1 = arith.constant 0 : i32
    return %c0_i32, %c0_i32_0 : i32, i32
  }
  func.func @transform_4(%arg0: i32) -> (i32, i32) {
    %c0_i32 = arith.constant 0 : i32
    %c0_i32_0 = arith.constant 0 : i32
    %c0_i32_1 = arith.constant 0 : i32
    return %c0_i32, %c0_i32_0 : i32, i32
  }
  func.func @transform_5(%arg0: i32) -> (i32, i32) {
    %c0_i32 = arith.constant 0 : i32
    %c0_i32_0 = arith.constant 0 : i32
    %c0_i32_1 = arith.constant 0 : i32
    return %c0_i32, %c0_i32_0 : i32, i32
  }
  func.func @transform_6(%arg0: i32) -> i32 {
    %c0_i32 = arith.constant 0 : i32
    %c0_i32_0 = arith.constant 0 : i32
    return %c0_i32 : i32
  }
  func.func @transform_7(%arg0: i32) -> (i32, i32) {
    %c0_i32 = arith.constant 0 : i32
    %c0_i32_0 = arith.constant 0 : i32
    return %arg0, %c0_i32 : i32, i32
  }
}

</mosaic_0001>

<llo_original>
// kernel: tpu_custom_call.1
$region0: #{tpu_custom_call.1}
  #allocation0 [shape = 'u32[]', space=smem, size = 0x4, offset = 0x4, fixed_abs, tag = 'smem constant byte address 0x4 - core index']
  #allocation1 [shape = 'u32[144,128]{1,0:T(1,128)}', space=vmem, size = 0x12000, scoped, tag = 'internal scratch']
  #allocation2 [shape = 'f32[1]{0:T(128)S(6)}', space=smem, size = 0x200, scoped, tag = 'scoped memory for tpu_custom_call.1']
  %s0 = inlined_call_operand.hbm [shape: f32[16,128], index: 0, kind: input, shape index: {}]
  %s1 = inlined_call_operand.vmem [shape: f32[128,256], index: 1, kind: input, shape index: {}]
  %s2 = inlined_call_operand.vmem [shape: f32[1,256], index: 2, kind: input, shape index: {}]
  %s3 = inlined_call_operand.hbm [shape: f32[256,256], index: 3, kind: input, shape index: {}]
  %s4 = inlined_call_operand.vmem [shape: f32[1,256], index: 4, kind: input, shape index: {}]
  %s5 = inlined_call_operand.vmem [shape: f32[256,1], index: 5, kind: input, shape index: {}]
  %s6 = inlined_call_operand.<no memory space> [shape: f32[1], index: 6, kind: input, shape index: {}]
  %s7 = inlined_call_operand.vmem [shape: f32[16,1], index: 7, kind: output, shape index: {}]
  %s8 = sld [smem:[#allocation0]]
  $region46: #{tpu_custom_call.1} parent=0
    _
  %s10 = ssub.s32 1, %s8
  %s11 = scalar_select 0, %s10, %s8
  %12 = sst [smem:[#allocation2]] %s6
  $region1: #{tpu_custom_call.1} parent=0
    #allocation3 [shape = 'u8[8192]{0}', space=vmem, size = 0x2000, scoped, tag = 'input window, operand 0, single buffered']
    #allocation4 [shape = 's32[1]{0}', space=sflag, size = 0x4, scoped, tag = 'scoped memory for tpu_custom_call.1']
    #allocation5 [shape = 'u8[262144]{0}', space=vmem, size = 0x40000, scoped, tag = 'input window, operand 3, single buffered']
    #allocation6 [shape = 's32[1]{0}', space=sflag, size = 0x4, scoped, tag = 'scoped memory for tpu_custom_call.1']
    %13 = vsyncpa [#allocation4], 0
    %14 = vsyncpa [#allocation6], 0
    // Predicated region
    $region2: #{tpu_custom_call.1} parent=1 // pred_check
      _
    $region3: #{tpu_custom_call.1} parent=1 // pred_check_branch
      %16 = sbr.rel (0) target = $region5
    $region4: #{tpu_custom_call.1} parent=1 // pred_region
      %s18 = ssub.s32 256, 256
      %19 = vsyncadd [#allocation4], %s18
      %s20 = sshll.u32 [#allocation3], 4
      %s21 = int_to_ptr.vmem [resolvable:$true] %s20
      %26 = dma.hbm_to_vmem [thread:$0]  %s0, 256, %s21, [#allocation4], 128, 128, 8
    $region5: #{tpu_custom_call.1} parent=1 // pred_fallthru
      _
    // Predicated region
    $region6: #{tpu_custom_call.1} parent=1 // pred_check
      _
    $region7: #{tpu_custom_call.1} parent=1 // pred_check_branch
      %28 = sbr.rel (0) target = $region9
    $region8: #{tpu_custom_call.1} parent=1 // pred_region
      _
    $region9: #{tpu_custom_call.1} parent=1 // pred_fallthru
      _
    // Predicated region
    $region10: #{tpu_custom_call.1} parent=1 // pred_check
      _
    $region11: #{tpu_custom_call.1} parent=1 // pred_check_branch
      %30 = sbr.rel (0) target = $region13
    $region12: #{tpu_custom_call.1} parent=1 // pred_region
      _
    $region13: #{tpu_custom_call.1} parent=1 // pred_fallthru
      _
    // Predicated region
    $region14: #{tpu_custom_call.1} parent=1 // pred_check
      _
    $region15: #{tpu_custom_call.1} parent=1 // pred_check_branch
      %32 = sbr.rel (0) target = $region17
    $region16: #{tpu_custom_call.1} parent=1 // pred_region
      %s34 = ssub.s32 8192, 8192
      %35 = vsyncadd [#allocation6], %s34
      %s36 = sshll.u32 [#allocation5], 4
      %s37 = int_to_ptr.vmem [resolvable:$true] %s36
      %42 = dma.hbm_to_vmem [thread:$0]  %s3, 8192, %s37, [#allocation6], 256, 256, 16
    $region17: #{tpu_custom_call.1} parent=1 // pred_fallthru
      _
    // Predicated region
    $region18: #{tpu_custom_call.1} parent=1 // pred_check
      _
    $region19: #{tpu_custom_call.1} parent=1 // pred_check_branch
      %44 = sbr.rel (0) target = $region21
    $region20: #{tpu_custom_call.1} parent=1 // pred_region
      _
    $region21: #{tpu_custom_call.1} parent=1 // pred_fallthru
      _
    // Predicated region
    $region22: #{tpu_custom_call.1} parent=1 // pred_check
      _
    $region23: #{tpu_custom_call.1} parent=1 // pred_check_branch
      %46 = sbr.rel (0) target = $region25
    $region24: #{tpu_custom_call.1} parent=1 // pred_region
      _
    $region25: #{tpu_custom_call.1} parent=1 // pred_fallthru
      _
    // Predicated region
    $region26: #{tpu_custom_call.1} parent=1 // pred_check
      _
    $region27: #{tpu_custom_call.1} parent=1 // pred_check_branch
      %48 = sbr.rel (0) target = $region29
    $region28: #{tpu_custom_call.1} parent=1 // pred_region
      _
    $region29: #{tpu_custom_call.1} parent=1 // pred_fallthru
      _
    // Predicated region
    $region30: #{tpu_custom_call.1} parent=1 // pred_check
      _
    $region31: #{tpu_custom_call.1} parent=1 // pred_check_branch
      %50 = sbr.rel (0) target = $region33
    $region32: #{tpu_custom_call.1} parent=1 // pred_region
      %51 = dma.done [#allocation4], 256
    $region33: #{tpu_custom_call.1} parent=1 // pred_fallthru
      _
    // Predicated region
    $region34: #{tpu_custom_call.1} parent=1 // pred_check
      _
    $region35: #{tpu_custom_call.1} parent=1 // pred_check_branch
      %53 = sbr.rel (0) target = $region37
    $region36: #{tpu_custom_call.1} parent=1 // pred_region
      %54 = dma.done [#allocation6], 8192
    $region37: #{tpu_custom_call.1} parent=1 // pred_fallthru
      _
    %v55 = vld [vmem:[#allocation3] sm:$0xff]
    %v56 = vld [vmem:[#allocation3 + $0x8] sm:$0xff]
    %v57 = vld [vmem:[%s1] sm:$0xff]
    %v58 = vld [vmem:[%s1 + $0x8] sm:$0xff]
    %v59 = vld [vmem:[%s1 + $0x10] sm:$0xff]
    %v60 = vld [vmem:[%s1 + $0x18] sm:$0xff]
    %v61 = vld [vmem:[%s1 + $0x20] sm:$0xff]
    %v62 = vld [vmem:[%s1 + $0x28] sm:$0xff]
    %v63 = vld [vmem:[%s1 + $0x30] sm:$0xff]
    %v64 = vld [vmem:[%s1 + $0x38] sm:$0xff]
    %v65 = vld [vmem:[%s1 + $0x40] sm:$0xff]
    %v66 = vld [vmem:[%s1 + $0x48] sm:$0xff]
    %v67 = vld [vmem:[%s1 + $0x50] sm:$0xff]
    %v68 = vld [vmem:[%s1 + $0x58] sm:$0xff]
    %v69 = vld [vmem:[%s1 + $0x60] sm:$0xff]
    %v70 = vld [vmem:[%s1 + $0x68] sm:$0xff]
    %v71 = vld [vmem:[%s1 + $0x70] sm:$0xff]
    %v72 = vld [vmem:[%s1 + $0x78] sm:$0xff]
    %v73 = vld [vmem:[%s1 + $0x80] sm:$0xff]
    %v74 = vld [vmem:[%s1 + $0x88] sm:$0xff]
    %v75 = vld [vmem:[%s1 + $0x90] sm:$0xff]
    %v76 = vld [vmem:[%s1 + $0x98] sm:$0xff]
    %v77 = vld [vmem:[%s1 + $0xa0] sm:$0xff]
    %v78 = vld [vmem:[%s1 + $0xa8] sm:$0xff]
    %v79 = vld [vmem:[%s1 + $0xb0] sm:$0xff]
    %v80 = vld [vmem:[%s1 + $0xb8] sm:$0xff]
    %v81 = vld [vmem:[%s1 + $0xc0] sm:$0xff]
    %v82 = vld [vmem:[%s1 + $0xc8] sm:$0xff]
    %v83 = vld [vmem:[%s1 + $0xd0] sm:$0xff]
    %v84 = vld [vmem:[%s1 + $0xd8] sm:$0xff]
    %v85 = vld [vmem:[%s1 + $0xe0] sm:$0xff]
    %v86 = vld [vmem:[%s1 + $0xe8] sm:$0xff]
    %v87 = vld [vmem:[%s1 + $0xf0] sm:$0xff]
    %v88 = vld [vmem:[%s1 + $0xf8] sm:$0xff]
    %v89 = vld [vmem:[%s2] sm:$0x3]
    %v91 = vlaneseq
    %v92 = vshrl.u32 %v91, 7
    %v93 = vsub.s32 0, %v92
    %v94 = vrot.slane %v89, %v93
    %v95 = vlaneseq
    %v96 = vshrl.u32 %v95, 7
    %v97 = vsub.s32 1, %v96
    %v98 = vrot.slane %v89, %v97
    %101 = vmatprep.subr.mxu0 %v88
    %102 = vmatpush1.msra.mxu0 %v87
    %103 = vmatprep.subr.mxu0 %v86
    %104 = vmatpush1.msra.mxu0 %v85
    %105 = vmatprep.subr.mxu0 %v84
    %106 = vmatpush1.msra.mxu0 %v83
    %107 = vmatprep.subr.mxu0 %v82
    %108 = vmatpush1.msra.mxu0 %v81
    %109 = vmatprep.subr.mxu0 %v80
    %110 = vmatpush1.msra.mxu0 %v79
    %111 = vmatprep.subr.mxu0 %v78
    %112 = vmatpush1.msra.mxu0 %v77
    %113 = vmatprep.subr.mxu0 %v76
    %114 = vmatpush1.msra.mxu0 %v75
    %115 = vmatprep.subr.mxu0 %v74
    %116 = vmatpush1.msra.mxu0 %v73
    %117 = vmatprep.subr.mxu0 %v72
    %118 = vmatpush1.msra.mxu0 %v71
    %119 = vmatprep.subr.mxu0 %v70
    %120 = vmatpush1.msra.mxu0 %v69
    %121 = vmatprep.subr.mxu0 %v68
    %122 = vmatpush1.msra.mxu0 %v67
    %123 = vmatprep.subr.mxu0 %v66
    %124 = vmatpush1.msra.mxu0 %v65
    %125 = vmatprep.subr.mxu0 %v64
    %126 = vmatpush1.msra.mxu0 %v63
    %127 = vmatprep.subr.mxu0 %v62
    %128 = vmatpush1.msra.mxu0 %v61
    %129 = vmatprep.subr.mxu0 %v60
    %130 = vmatpush1.msra.mxu0 %v59
    %131 = vmatprep.subr.mxu0 %v58
    %132 = vmatpush1.msra.mxu0 %v57
    %133 = vmatprep.subr.mxu0 0.0
    %134 = vmatpush2.msra.mxu0 0.0
    %135 = vmatprep.subr.mxu0 0.0
    %136 = vmatpush2.msra.mxu0 0.0
    %137 = vmatprep.subr.mxu0 0.0
    %138 = vmatpush2.msra.mxu0 0.0
    %139 = vmatprep.subr.mxu0 0.0
    %140 = vmatpush2.msra.mxu0 0.0
    %141 = vmatprep.subr.mxu0 0.0
    %142 = vmatpush2.msra.mxu0 0.0
    %143 = vmatprep.subr.mxu0 0.0
    %144 = vmatpush2.msra.mxu0 0.0
    %145 = vmatprep.subr.mxu0 0.0
    %146 = vmatpush2.msra.mxu0 0.0
    %147 = vmatprep.subr.mxu0 0.0
    %148 = vmatpush2.msra.mxu0 0.0
    %149 = vmatprep.subr.mxu0 0.0
    %150 = vmatpush2.msra.mxu0 0.0
    %151 = vmatprep.subr.mxu0 0.0
    %152 = vmatpush2.msra.mxu0 0.0
    %153 = vmatprep.subr.mxu0 0.0
    %154 = vmatpush2.msra.mxu0 0.0
    %155 = vmatprep.subr.mxu0 0.0
    %156 = vmatpush2.msra.mxu0 0.0
    %157 = vmatprep.subr.mxu0 0.0
    %158 = vmatpush2.msra.mxu0 0.0
    %159 = vmatprep.subr.mxu0 0.0
    %160 = vmatpush2.msra.mxu0 0.0
    %161 = vmatprep.subr.mxu0 0.0
    %162 = vmatpush2.msra.mxu0 0.0
    %163 = vmatprep.subr.mxu0 0.0
    %164 = vmatpush2.msra.mxu0 0.0
    %165 = vmatprep.mubr.f32.mxu0 0.0
    %166 = vmatmul.mubr.f32.gmra.mxu0 %v55
    %v167 = vpop.f32.mrf.mxu0
    %v168 = vadd.f32 %v94, %v167
    %v169 = vpop.f32.mrf.mxu0
    %v170 = vadd.f32 %v98, %v169
    %171 = vmatprep.mubr.f32.mxu0 0.0
    %172 = vmatmul.mubr.f32.gmra.mxu0 %v56
    %v173 = vpop.f32.mrf.mxu0
    %v174 = vadd.f32 %v94, %v173
    %v175 = vpop.f32.mrf.mxu0
    %v176 = vadd.f32 %v98, %v175
    %177 = vdwg.mxu0
    %v178 = vmax.f32 %v168, 0.0
    %v179 = vmax.f32 %v170, 0.0
    %v180 = vmax.f32 %v174, 0.0
    %v181 = vmax.f32 %v176, 0.0
    %v182 = vld [vmem:[#allocation5] sm:$0xff]
    %v183 = vld [vmem:[#allocation5 + $0x8] sm:$0xff]
    %v184 = vld [vmem:[#allocation5 + $0x10] sm:$0xff]
    %v185 = vld [vmem:[#allocation5 + $0x18] sm:$0xff]
    %v186 = vld [vmem:[#allocation5 + $0x20] sm:$0xff]
    %v187 = vld [vmem:[#allocation5 + $0x28] sm:$0xff]
    %v188 = vld [vmem:[#allocation5 + $0x30] sm:$0xff]
    %v189 = vld [vmem:[#allocation5 + $0x38] sm:$0xff]
    %v190 = vld [vmem:[#allocation5 + $0x40] sm:$0xff]
    %v191 = vld [vmem:[#allocation5 + $0x48] sm:$0xff]
    %v192 = vld [vmem:[#allocation5 + $0x50] sm:$0xff]
    %v193 = vld [vmem:[#allocation5 + $0x58] sm:$0xff]
    %v194 = vld [vmem:[#allocation5 + $0x60] sm:$0xff]
    %v195 = vld [vmem:[#allocation5 + $0x68] sm:$0xff]
    %v196 = vld [vmem:[#allocation5 + $0x70] sm:$0xff]
    %v197 = vld [vmem:[#allocation5 + $0x78] sm:$0xff]
    %v198 = vld [vmem:[#allocation5 + $0x80] sm:$0xff]
    %v199 = vld [vmem:[#allocation5 + $0x88] sm:$0xff]
    %v200 = vld [vmem:[#allocation5 + $0x90] sm:$0xff]
    %v201 = vld [vmem:[#allocation5 + $0x98] sm:$0xff]
    %v202 = vld [vmem:[#allocation5 + $0xa0] sm:$0xff]
    %v203 = vld [vmem:[#allocation5 + $0xa8] sm:$0xff]
    %v204 = vld [vmem:[#allocation5 + $0xb0] sm:$0xff]
    %v205 = vld [vmem:[#allocation5 + $0xb8] sm:$0xff]
    %v206 = vld [vmem:[#allocation5 + $0xc0] sm:$0xff]
    %v207 = vld [vmem:[#allocation5 + $0xc8] sm:$0xff]
    %v208 = vld [vmem:[#allocation5 + $0xd0] sm:$0xff]
    %v209 = vld [vmem:[#allocation5 + $0xd8] sm:$0xff]
    %v210 = vld [vmem:[#allocation5 + $0xe0] sm:$0xff]
    %v211 = vld [vmem:[#allocation5 + $0xe8] sm:$0xff]
    %v212 = vld [vmem:[#allocation5 + $0xf0] sm:$0xff]
    %v213 = vld [vmem:[#allocation5 + $0xf8] sm:$0xff]
    %v214 = vld [vmem:[#allocation5 + $0x100] sm:$0xff]
    %v215 = vld [vmem:[#allocation5 + $0x108] sm:$0xff]
    %v216 = vld [vmem:[#allocation5 + $0x110] sm:$0xff]
    %v217 = vld [vmem:[#allocation5 + $0x118] sm:$0xff]
    %v218 = vld [vmem:[#allocation5 + $0x120] sm:$0xff]
    %v219 = vld [vmem:[#allocation5 + $0x128] sm:$0xff]
    %v220 = vld [vmem:[#allocation5 + $0x130] sm:$0xff]
    %v221 = vld [vmem:[#allocation5 + $0x138] sm:$0xff]
    %v222 = vld [vmem:[#allocation5 + $0x140] sm:$0xff]
    %v223 = vld [vmem:[#allocation5 + $0x148] sm:$0xff]
    %v224 = vld [vmem:[#allocation5 + $0x150] sm:$0xff]
    %v225 = vld [vmem:[#allocation5 + $0x158] sm:$0xff]
    %v226 = vld [vmem:[#allocation5 + $0x160] sm:$0xff]
    %v227 = vld [vmem:[#allocation5 + $0x168] sm:$0xff]
    %v228 = vld [vmem:[#allocation5 + $0x170] sm:$0xff]
    %v229 = vld [vmem:[#allocation5 + $0x178] sm:$0xff]
    %v230 = vld [vmem:[#allocation5 + $0x180] sm:$0xff]
    %v231 = vld [vmem:[#allocation5 + $0x188] sm:$0xff]
    %v232 = vld [vmem:[#allocation5 + $0x190] sm:$0xff]
    %v233 = vld [vmem:[#allocation5 + $0x198] sm:$0xff]
    %v234 = vld [vmem:[#allocation5 + $0x1a0] sm:$0xff]
    %v235 = vld [vmem:[#allocation5 + $0x1a8] sm:$0xff]
    %v236 = vld [vmem:[#allocation5 + $0x1b0] sm:$0xff]
    %v237 = vld [vmem:[#allocation5 + $0x1b8] sm:$0xff]
    %v238 = vld [vmem:[#allocation5 + $0x1c0] sm:$0xff]
    %v239 = vld [vmem:[#allocation5 + $0x1c8] sm:$0xff]
    %v240 = vld [vmem:[#allocation5 + $0x1d0] sm:$0xff]
    %v241 = vld [vmem:[#allocation5 + $0x1d8] sm:$0xff]
    %v242 = vld [vmem:[#allocation5 + $0x1e0] sm:$0xff]
    %v243 = vld [vmem:[#allocation5 + $0x1e8] sm:$0xff]
    %v244 = vld [vmem:[#allocation5 + $0x1f0] sm:$0xff]
    %v245 = vld [vmem:[#allocation5 + $0x1f8] sm:$0xff]
    %v246 = vld [vmem:[%s4] sm:$0x3]
    %v248 = vlaneseq
    %v249 = vshrl.u32 %v248, 7
    %v250 = vsub.s32 0, %v249
    %v251 = vrot.slane %v246, %v250
    %v252 = vlaneseq
    %v253 = vshrl.u32 %v252, 7
    %v254 = vsub.s32 1, %v253
    %v255 = vrot.slane %v246, %v254
    %258 = vmatprep.subr.mxu0 %v213
    %259 = vmatpush1.msra.mxu0 %v212
    %260 = vmatprep.subr.mxu0 %v211
    %261 = vmatpush1.msra.mxu0 %v210
    %262 = vmatprep.subr.mxu0 %v209
    %263 = vmatpush1.msra.mxu0 %v208
    %264 = vmatprep.subr.mxu0 %v207
    %265 = vmatpush1.msra.mxu0 %v206
    %266 = vmatprep.subr.mxu0 %v205
    %267 = vmatpush1.msra.mxu0 %v204
    %268 = vmatprep.subr.mxu0 %v203
    %269 = vmatpush1.msra.mxu0 %v202
    %270 = vmatprep.subr.mxu0 %v201
    %271 = vmatpush1.msra.mxu0 %v200
    %272 = vmatprep.subr.mxu0 %v199
    %273 = vmatpush1.msra.mxu0 %v198
    %274 = vmatprep.subr.mxu0 %v197
    %275 = vmatpush1.msra.mxu0 %v196
    %276 = vmatprep.subr.mxu0 %v195
    %277 = vmatpush1.msra.mxu0 %v194
    %278 = vmatprep.subr.mxu0 %v193
    %279 = vmatpush1.msra.mxu0 %v192
    %280 = vmatprep.subr.mxu0 %v191
    %281 = vmatpush1.msra.mxu0 %v190
    %282 = vmatprep.subr.mxu0 %v189
    %283 = vmatpush1.msra.mxu0 %v188
    %284 = vmatprep.subr.mxu0 %v187
    %285 = vmatpush1.msra.mxu0 %v186
    %286 = vmatprep.subr.mxu0 %v185
    %287 = vmatpush1.msra.mxu0 %v184
    %288 = vmatprep.subr.mxu0 %v183
    %289 = vmatpush1.msra.mxu0 %v182
    %290 = vmatprep.subr.mxu0 %v245
    %291 = vmatpush2.msra.mxu0 %v244
    %292 = vmatprep.subr.mxu0 %v243
    %293 = vmatpush2.msra.mxu0 %v242
    %294 = vmatprep.subr.mxu0 %v241
    %295 = vmatpush2.msra.mxu0 %v240
    %296 = vmatprep.subr.mxu0 %v239
    %297 = vmatpush2.msra.mxu0 %v238
    %298 = vmatprep.subr.mxu0 %v237
    %299 = vmatpush2.msra.mxu0 %v236
    %300 = vmatprep.subr.mxu0 %v235
    %301 = vmatpush2.msra.mxu0 %v234
    %302 = vmatprep.subr.mxu0 %v233
    %303 = vmatpush2.msra.mxu0 %v232
    %304 = vmatprep.subr.mxu0 %v231
    %305 = vmatpush2.msra.mxu0 %v230
    %306 = vmatprep.subr.mxu0 %v229
    %307 = vmatpush2.msra.mxu0 %v228
    %308 = vmatprep.subr.mxu0 %v227
    %309 = vmatpush2.msra.mxu0 %v226
    %310 = vmatprep.subr.mxu0 %v225
    %311 = vmatpush2.msra.mxu0 %v224
    %312 = vmatprep.subr.mxu0 %v223
    %313 = vmatpush2.msra.mxu0 %v222
    %314 = vmatprep.subr.mxu0 %v221
    %315 = vmatpush2.msra.mxu0 %v220
    %316 = vmatprep.subr.mxu0 %v219
    %317 = vmatpush2.msra.mxu0 %v218
    %318 = vmatprep.subr.mxu0 %v217
    %319 = vmatpush2.msra.mxu0 %v216
    %320 = vmatprep.subr.mxu0 %v215
    %321 = vmatpush2.msra.mxu0 %v214
    %322 = vmatprep.mubr.f32.mxu0 %v179
    %323 = vmatmul.mubr.f32.gmra.mxu0 %v178
    %v324 = vpop.f32.mrf.mxu0
    %v325 = vadd.f32 %v251, %v324
    %v326 = vpop.f32.mrf.mxu0
    %v327 = vadd.f32 %v255, %v326
    %328 = vmatprep.mubr.f32.mxu0 %v181
    %329 = vmatmul.mubr.f32.gmra.mxu0 %v180
    %v330 = vpop.f32.mrf.mxu0
    %v331 = vadd.f32 %v251, %v330
    %v332 = vpop.f32.mrf.mxu0
    %v333 = vadd.f32 %v255, %v332
    %334 = vdwg.mxu0
    %v335 = vmax.f32 %v325, 0.0
    %v336 = vmax.f32 %v327, 0.0
    %v337 = vmax.f32 %v331, 0.0
    %v338 = vmax.f32 %v333, 0.0
    %v339 = vld [vmem:[%s5] sm:$0xff]
    %v340 = vld [vmem:[%s5 + $0x8] sm:$0xff]
    %v341 = vld [vmem:[%s5 + $0x10] sm:$0xff]
    %v342 = vld [vmem:[%s5 + $0x18] sm:$0xff]
    %v343 = vld [vmem:[%s5 + $0x20] sm:$0xff]
    %v344 = vld [vmem:[%s5 + $0x28] sm:$0xff]
    %v345 = vld [vmem:[%s5 + $0x30] sm:$0xff]
    %v346 = vld [vmem:[%s5 + $0x38] sm:$0xff]
    %v347 = vld [vmem:[%s5 + $0x40] sm:$0xff]
    %v348 = vld [vmem:[%s5 + $0x48] sm:$0xff]
    %v349 = vld [vmem:[%s5 + $0x50] sm:$0xff]
    %v350 = vld [vmem:[%s5 + $0x58] sm:$0xff]
    %v351 = vld [vmem:[%s5 + $0x60] sm:$0xff]
    %v352 = vld [vmem:[%s5 + $0x68] sm:$0xff]
    %v353 = vld [vmem:[%s5 + $0x70] sm:$0xff]
    %v354 = vld [vmem:[%s5 + $0x78] sm:$0xff]
    %v355 = vld [vmem:[%s5 + $0x80] sm:$0xff]
    %v356 = vld [vmem:[%s5 + $0x88] sm:$0xff]
    %v357 = vld [vmem:[%s5 + $0x90] sm:$0xff]
    %v358 = vld [vmem:[%s5 + $0x98] sm:$0xff]
    %v359 = vld [vmem:[%s5 + $0xa0] sm:$0xff]
    %v360 = vld [vmem:[%s5 + $0xa8] sm:$0xff]
    %v361 = vld [vmem:[%s5 + $0xb0] sm:$0xff]
    %v362 = vld [vmem:[%s5 + $0xb8] sm:$0xff]
    %v363 = vld [vmem:[%s5 + $0xc0] sm:$0xff]
    %v364 = vld [vmem:[%s5 + $0xc8] sm:$0xff]
    %v365 = vld [vmem:[%s5 + $0xd0] sm:$0xff]
    %v366 = vld [vmem:[%s5 + $0xd8] sm:$0xff]
    %v367 = vld [vmem:[%s5 + $0xe0] sm:$0xff]
    %v368 = vld [vmem:[%s5 + $0xe8] sm:$0xff]
    %v369 = vld [vmem:[%s5 + $0xf0] sm:$0xff]
    %v370 = vld [vmem:[%s5 + $0xf8] sm:$0xff]
    %s371 = sld [smem:[#allocation2]]
    %v372 = vstv %s371
    %373 = vmatprep.subr.mxu0 0.0
    %374 = vmatpush1.msra.mxu0 %v354
    %375 = vmatprep.subr.mxu0 0.0
    %376 = vmatpush1.msra.mxu0 %v353
    %377 = vmatprep.subr.mxu0 0.0
    %378 = vmatpush1.msra.mxu0 %v352
    %379 = vmatprep.subr.mxu0 0.0
    %380 = vmatpush1.msra.mxu0 %v351
    %381 = vmatprep.subr.mxu0 0.0
    %382 = vmatpush1.msra.mxu0 %v350
    %383 = vmatprep.subr.mxu0 0.0
    %384 = vmatpush1.msra.mxu0 %v349
    %385 = vmatprep.subr.mxu0 0.0
    %386 = vmatpush1.msra.mxu0 %v348
    %387 = vmatprep.subr.mxu0 0.0
    %388 = vmatpush1.msra.mxu0 %v347
    %389 = vmatprep.subr.mxu0 0.0
    %390 = vmatpush1.msra.mxu0 %v346
    %391 = vmatprep.subr.mxu0 0.0
    %392 = vmatpush1.msra.mxu0 %v345
    %393 = vmatprep.subr.mxu0 0.0
    %394 = vmatpush1.msra.mxu0 %v344
    %395 = vmatprep.subr.mxu0 0.0
    %396 = vmatpush1.msra.mxu0 %v343
    %397 = vmatprep.subr.mxu0 0.0
    %398 = vmatpush1.msra.mxu0 %v342
    %399 = vmatprep.subr.mxu0 0.0
    %400 = vmatpush1.msra.mxu0 %v341
    %401 = vmatprep.subr.mxu0 0.0
    %402 = vmatpush1.msra.mxu0 %v340
    %403 = vmatprep.subr.mxu0 0.0
    %404 = vmatpush1.msra.mxu0 %v339
    %405 = vmatprep.subr.mxu0 0.0
    %406 = vmatpush2.msra.mxu0 %v370
    %407 = vmatprep.subr.mxu0 0.0
    %408 = vmatpush2.msra.mxu0 %v369
    %409 = vmatprep.subr.mxu0 0.0
    %410 = vmatpush2.msra.mxu0 %v368
    %411 = vmatprep.subr.mxu0 0.0
    %412 = vmatpush2.msra.mxu0 %v367
    %413 = vmatprep.subr.mxu0 0.0
    %414 = vmatpush2.msra.mxu0 %v366
    %415 = vmatprep.subr.mxu0 0.0
    %416 = vmatpush2.msra.mxu0 %v365
    %417 = vmatprep.subr.mxu0 0.0
    %418 = vmatpush2.msra.mxu0 %v364
    %419 = vmatprep.subr.mxu0 0.0
    %420 = vmatpush2.msra.mxu0 %v363
    %421 = vmatprep.subr.mxu0 0.0
    %422 = vmatpush2.msra.mxu0 %v362
    %423 = vmatprep.subr.mxu0 0.0
    %424 = vmatpush2.msra.mxu0 %v361
    %425 = vmatprep.subr.mxu0 0.0
    %426 = vmatpush2.msra.mxu0 %v360
    %427 = vmatprep.subr.mxu0 0.0
    %428 = vmatpush2.msra.mxu0 %v359
    %429 = vmatprep.subr.mxu0 0.0
    %430 = vmatpush2.msra.mxu0 %v358
    %431 = vmatprep.subr.mxu0 0.0
    %432 = vmatpush2.msra.mxu0 %v357
    %433 = vmatprep.subr.mxu0 0.0
    %434 = vmatpush2.msra.mxu0 %v356
    %435 = vmatprep.subr.mxu0 0.0
    %436 = vmatpush2.msra.mxu0 %v355
    %437 = vmatprep.mubr.f32.mxu0 %v336
    %438 = vmatmul.mubr.f32.gmra.mxu0 %v335
    %v439 = vpop.f32.mrf.mxu0
    %v440 = vadd.f32 %v372, %v439
    %v441 = vpop.f32.mrf.mxu0
    %442 = vmatprep.mubr.f32.mxu0 %v338
    %443 = vmatmul.mubr.f32.gmra.mxu0 %v337
    %v444 = vpop.f32.mrf.mxu0
    %v445 = vadd.f32 %v372, %v444
    %v446 = vpop.f32.mrf.mxu0
    %447 = vdwg.mxu0
    %vm448 = vcmask 7168
    %449 = vst.msk [vmem:[%s7] sm:$0xff] %vm448, %v440
    %450 = vst.msk [vmem:[%s7 + $0x8] sm:$0xff] %vm448, %v445
    // Predicated region
    $region38: #{tpu_custom_call.1} parent=1 // pred_check
      _
    $region39: #{tpu_custom_call.1} parent=1 // pred_check_branch
      %452 = sbr.rel (0) target = $region41
    $region40: #{tpu_custom_call.1} parent=1 // pred_region
      _
    $region41: #{tpu_custom_call.1} parent=1 // pred_fallthru
      _
    // Predicated region
    $region42: #{tpu_custom_call.1} parent=1 // pred_check
      _
    $region43: #{tpu_custom_call.1} parent=1 // pred_check_branch
      %454 = sbr.rel (0) target = $region45
    $region44: #{tpu_custom_call.1} parent=1 // pred_region
      _
    $region45: #{tpu_custom_call.1} parent=1 // pred_fallthru
      _
    %455 = vsyncpa [#allocation4], 1
    %456 = vsyncpa [#allocation6], 1

</llo_original>
